<compile_context>
chip_gen: v7x
topology: tpu7x:2x2x1
jax: 0.10.0
libtpu: 0.0.40
codegen_flags: <defaults>
</compile_context>

<pallas_src>
import jax
import jax.numpy as jnp
from jax.experimental import pallas as pl
from jax.experimental.pallas import tpu as pltpu


def gru_v3_cell_kernel(x_ref, h_ref, wx_ref, wh_ref, wrh_ref, b_ref, o_ref):
    """One batch-tile of the MyGRUv3Cell forward pass (fused-gate layout)."""
    H = o_ref.shape[-1]
    x = x_ref[...]
    h = h_ref[...]

    # Fused x-side matmul: output columns are [gate-r | gate-z | candidate],
    # with the pre-summed biases (bx1+bh1 | bx2+bh2 | bx3+brh) folded in.
    # Independent of r, so it is issued before any transcendental work.
    xg = jnp.dot(x, wx_ref[...], preferred_element_type=jnp.float32) + b_ref[...]

    # Fused h-side gate matmul: output columns are [gate-r | gate-z].
    hg = jnp.dot(h, wh_ref[...], preferred_element_type=jnp.float32)

    r = jax.nn.sigmoid(xg[:, 0 * H:1 * H] + hg[:, 0 * H:1 * H])
    z = jax.nn.sigmoid(xg[:, 1 * H:2 * H] + hg[:, 1 * H:2 * H])

    # Only this matmul depends on r (sigmoid -> MXU -> tanh tail).
    cand = jnp.dot((r * h).astype(wrh_ref.dtype), wrh_ref[...],
                   preferred_element_type=jnp.float32)
    htilde = jnp.tanh(xg[:, 2 * H:3 * H] + cand)

    hdot = z * h + (1.0 - z) * htilde
    o_ref[...] = hdot.astype(o_ref.dtype)


def pack_params(params):
    """Fuse the six Linear layers into three matmul operands + one bias row."""
    (wx1, bx1, wx2, bx2, wx3, bx3,
     wh1, bh1, wh2, bh2, wrh, brh) = params
    wx = jnp.concatenate([wx1, wx2, wx3], axis=1)                    # (I, 3H)
    wh = jnp.concatenate([wh1, wh2], axis=1)                         # (H, 2H)
    b = jnp.concatenate([bx1 + bh1, bx2 + bh2, bx3 + brh], axis=1)   # (1, 3H)
    return wx, wh, wrh, b


def _pick_tile_b(B):
    """Largest batch tile <= 256 that divides B and leaves >=2 grid steps
    (v7x megacore; 256 matches v6e/v7x MXU rows).  Falls back to the full
    batch for small/odd B, where block shapes must equal the full dims."""
    if B % 8 == 0:
        for t in (256, 128, 64, 32, 16, 8):
            if 2 * t <= B and B % t == 0:
                return t
    return B


def my_gru_v3_cell(x, state, params, *, tile_b=None):
    """Pallas wrapper: batch-tiled grid, fused gate weights resident in VMEM."""
    B, I = x.shape
    Bh, H = state.shape
    assert B == Bh
    wx, wh, wrh, b = pack_params(params)

    if tile_b is None:
        tile_b = _pick_tile_b(B)
    assert B % tile_b == 0
    # (8, 128) tiling rule: block dims must be sublane-aligned or full extent.
    assert tile_b == B or tile_b % 8 == 0
    grid = (B // tile_b,)

    # VMEM budget: resident (single-buffered) weights + double-buffered tiles.
    f32 = 4
    weight_bytes = (I * 3 * H + H * 2 * H + H * H + 3 * H) * f32
    act_bytes = 2 * (tile_b * I + 2 * tile_b * H) * f32
    vmem_limit = int(min(64 * 1024 * 1024,
                         max(32 * 1024 * 1024, 2 * (weight_bytes + act_bytes))))

    cost = pl.CostEstimate(
        flops=2 * B * (3 * I * H + 3 * H * H),
        transcendentals=3 * B * H,
        bytes_accessed=f32 * (B * I + 2 * B * H) + weight_bytes,
    )

    def build(single_buffer_weights):
        if single_buffer_weights:
            def wspec(shape):
                return pl.BlockSpec(shape, lambda i: (0, 0),
                                    pipeline_mode=pl.Buffered(1))
        else:
            def wspec(shape):
                return pl.BlockSpec(shape, lambda i: (0, 0))

        in_specs = [
            pl.BlockSpec((tile_b, I), lambda i: (i, 0)),   # x batch tile
            pl.BlockSpec((tile_b, H), lambda i: (i, 0)),   # h batch tile
            wspec((I, 3 * H)),                             # fused Wx
            wspec((H, 2 * H)),                             # fused Wh (gates)
            wspec((H, H)),                                 # Wrh
            wspec((1, 3 * H)),                             # fused bias row
        ]
        return pl.pallas_call(
            gru_v3_cell_kernel,
            out_shape=jax.ShapeDtypeStruct((B, H), state.dtype),
            grid_spec=pltpu.PrefetchScalarGridSpec(
                num_scalar_prefetch=0,
                grid=grid,
                in_specs=in_specs,
                out_specs=pl.BlockSpec((tile_b, H), lambda i: (i, 0)),
            ),
            compiler_params=pltpu.CompilerParams(
                dimension_semantics=("parallel",),
                vmem_limit_bytes=vmem_limit),
            cost_estimate=cost,
        )

    try:
        return build(True)(x, state, wx, wh, wrh, b)
    except Exception:
        # If pl.Buffered(1) is rejected by this jax build, fall back to the
        # default double-buffered weight specs (correctness unaffected).
        return build(False)(x, state, wx, wh, wrh, b)


def init_params(key, input_size, hidden_size, dtype=jnp.float32):
    """torch.nn.Linear-style uniform init.  Weights stored transposed as
    (in_features, out_features), biases as (1, out_features) rows.
    Order: fc_x1, fc_x2, fc_x3, fc_h1, fc_h2, fc_rh (weight, bias each)."""
    fan_ins = [input_size, input_size, input_size,
               hidden_size, hidden_size, hidden_size]
    keys = jax.random.split(key, 2 * len(fan_ins))
    params = []
    for idx, fan_in in enumerate(fan_ins):
        bound = fan_in ** -0.5
        w = jax.random.uniform(keys[2 * idx], (fan_in, hidden_size), dtype,
                               -bound, bound)
        bb = jax.random.uniform(keys[2 * idx + 1], (1, hidden_size), dtype,
                                -bound, bound)
        params += [w, bb]
    return tuple(params)


def reference_forward(x, state, params):
    """Pure-JAX reference matching the PyTorch forward exactly."""
    (wx1, bx1, wx2, bx2, wx3, bx3,
     wh1, bh1, wh2, bh2, wrh, brh) = params
    r = jax.nn.sigmoid(x @ wx1 + bx1 + state @ wh1 + bh1)
    z = jax.nn.sigmoid(x @ wx2 + bx2 + state @ wh2 + bh2)
    htilde = jnp.tanh(x @ wx3 + bx3 + (r * state) @ wrh + brh)
    return z * state + (1.0 - z) * htilde


if __name__ == "__main__":
    # TODO(synk): for production shapes, pad hidden_size to a multiple of 128
    # so output stores are lane-dense (the test keeps the module's H=32).
    B, INPUT_SIZE, HIDDEN_SIZE = 8, 16, 32

    key = jax.random.PRNGKey(0)
    k_x, k_h, k_p = jax.random.split(key, 3)

    x = jax.random.normal(k_x, (B, INPUT_SIZE), jnp.float32)
    state = jax.random.normal(k_h, (B, HIDDEN_SIZE), jnp.float32)
    params = init_params(k_p, INPUT_SIZE, HIDDEN_SIZE)

    out = my_gru_v3_cell(x, state, params)
    out = jax.block_until_ready(out)

    ref = reference_forward(x, state, params)
    assert out.shape == (B, HIDDEN_SIZE)
    assert jnp.allclose(out, ref, atol=1e-5, rtol=1e-5), "mismatch vs reference"

    print("KERNEL_OK")
</pallas_src>

<mosaic_0001>
module attributes {stable_mosaic.version = 11 : i64} {
  func.func @gru_v3_cell_kernel(%arg0: i32, %arg1: memref<8x16xf32, #tpu.memory_space<vmem>>, %arg2: memref<8x32xf32, #tpu.memory_space<vmem>>, %arg3: memref<16x96xf32, #tpu.memory_space<vmem>>, %arg4: memref<32x64xf32, #tpu.memory_space<vmem>>, %arg5: memref<32x32xf32, #tpu.memory_space<vmem>>, %arg6: memref<1x96xf32, #tpu.memory_space<vmem>>, %arg7: memref<8x32xf32, #tpu.memory_space<vmem>>) attributes {dimension_semantics = [#tpu.dimension_semantics<parallel>], iteration_bounds = array<i64: 1>, scalar_prefetch = 0 : i64, scratch_operands = 0 : i64, tpu.core_type = #tpu.core_type<tc>, window_params = [{transform_indices = @transform_0, window_bounds = array<i64: 8, 16>}, {transform_indices = @transform_1, window_bounds = array<i64: 8, 32>}, {pipeline_mode = #tpu.pipeline_mode<synchronous>, transform_indices = @transform_2, window_bounds = array<i64: 16, 96>}, {pipeline_mode = #tpu.pipeline_mode<synchronous>, transform_indices = @transform_3, window_bounds = array<i64: 32, 64>}, {pipeline_mode = #tpu.pipeline_mode<synchronous>, transform_indices = @transform_4, window_bounds = array<i64: 32, 32>}, {pipeline_mode = #tpu.pipeline_mode<synchronous>, transform_indices = @transform_5, window_bounds = array<i64: 1, 96>}, {transform_indices = @transform_6, window_bounds = array<i64: 8, 32>}]} {
    %c0 = arith.constant 0 : index
    %c0_0 = arith.constant 0 : index
    %0 = vector.load %arg1[%c0, %c0_0] : memref<8x16xf32, #tpu.memory_space<vmem>>, vector<8x16xf32>
    %c0_1 = arith.constant 0 : index
    %c0_2 = arith.constant 0 : index
    %1 = vector.load %arg2[%c0_1, %c0_2] : memref<8x32xf32, #tpu.memory_space<vmem>>, vector<8x32xf32>
    %c0_3 = arith.constant 0 : index
    %c0_4 = arith.constant 0 : index
    %2 = vector.load %arg3[%c0_3, %c0_4] : memref<16x96xf32, #tpu.memory_space<vmem>>, vector<16x96xf32>
    %cst = arith.constant dense<0.000000e+00> : vector<8x96xf32>
    %3 = tpu.matmul %0, %2, %cst {dimension_numbers = #tpu.dot_dimension_numbers<[1], [0], [0], [1], [0, 0, 1, 1], [], []>} : vector<8x16xf32>, vector<16x96xf32>, vector<8x96xf32> -> vector<8x96xf32>
    %c0_5 = arith.constant 0 : index
    %c0_6 = arith.constant 0 : index
    %4 = vector.load %arg6[%c0_5, %c0_6] : memref<1x96xf32, #tpu.memory_space<vmem>>, vector<1x96xf32>
    %5 = vector.broadcast %4 : vector<1x96xf32> to vector<8x96xf32>
    %6 = arith.addf %3, %5 : vector<8x96xf32>
    %c0_7 = arith.constant 0 : index
    %c0_8 = arith.constant 0 : index
    %7 = vector.load %arg4[%c0_7, %c0_8] : memref<32x64xf32, #tpu.memory_space<vmem>>, vector<32x64xf32>
    %cst_9 = arith.constant dense<0.000000e+00> : vector<8x64xf32>
    %8 = tpu.matmul %1, %7, %cst_9 {dimension_numbers = #tpu.dot_dimension_numbers<[1], [0], [0], [1], [0, 0, 1, 1], [], []>} : vector<8x32xf32>, vector<32x64xf32>, vector<8x64xf32> -> vector<8x64xf32>
    %9 = vector.extract_strided_slice %6 {offsets = [0, 0], sizes = [8, 32], strides = [1, 1]} : vector<8x96xf32> to vector<8x32xf32>
    %10 = vector.extract_strided_slice %8 {offsets = [0, 0], sizes = [8, 32], strides = [1, 1]} : vector<8x64xf32> to vector<8x32xf32>
    %11 = arith.addf %9, %10 : vector<8x32xf32>
    %12 = arith.negf %11 : vector<8x32xf32>
    %13 = math.exp %12 : vector<8x32xf32>
    %cst_10 = arith.constant 1.000000e+00 : f32
    %14 = vector.broadcast %cst_10 : f32 to vector<8x32xf32>
    %15 = arith.addf %14, %13 : vector<8x32xf32>
    %16 = arith.divf %14, %15 : vector<8x32xf32>
    %17 = vector.extract_strided_slice %6 {offsets = [0, 32], sizes = [8, 32], strides = [1, 1]} : vector<8x96xf32> to vector<8x32xf32>
    %18 = vector.extract_strided_slice %8 {offsets = [0, 32], sizes = [8, 32], strides = [1, 1]} : vector<8x64xf32> to vector<8x32xf32>
    %19 = arith.addf %17, %18 : vector<8x32xf32>
    %20 = arith.negf %19 : vector<8x32xf32>
    %21 = math.exp %20 : vector<8x32xf32>
    %cst_11 = arith.constant 1.000000e+00 : f32
    %22 = vector.broadcast %cst_11 : f32 to vector<8x32xf32>
    %23 = arith.addf %22, %21 : vector<8x32xf32>
    %24 = arith.divf %22, %23 : vector<8x32xf32>
    %25 = arith.mulf %16, %1 : vector<8x32xf32>
    %c0_12 = arith.constant 0 : index
    %c0_13 = arith.constant 0 : index
    %26 = vector.load %arg5[%c0_12, %c0_13] : memref<32x32xf32, #tpu.memory_space<vmem>>, vector<32x32xf32>
    %cst_14 = arith.constant dense<0.000000e+00> : vector<8x32xf32>
    %27 = tpu.matmul %25, %26, %cst_14 {dimension_numbers = #tpu.dot_dimension_numbers<[1], [0], [0], [1], [0, 0, 1, 1], [], []>} : vector<8x32xf32>, vector<32x32xf32>, vector<8x32xf32> -> vector<8x32xf32>
    %28 = vector.extract_strided_slice %6 {offsets = [0, 64], sizes = [8, 32], strides = [1, 1]} : vector<8x96xf32> to vector<8x32xf32>
    %29 = arith.addf %28, %27 : vector<8x32xf32>
    %30 = math.tanh %29 : vector<8x32xf32>
    %31 = arith.mulf %24, %1 : vector<8x32xf32>
    %cst_15 = arith.constant 1.000000e+00 : f32
    %32 = vector.broadcast %cst_15 : f32 to vector<8x32xf32>
    %33 = arith.subf %32, %24 : vector<8x32xf32>
    %34 = arith.mulf %33, %30 : vector<8x32xf32>
    %35 = arith.addf %31, %34 : vector<8x32xf32>
    %c0_16 = arith.constant 0 : index
    %c0_17 = arith.constant 0 : index
    %36 = vector.load %arg7[%c0_16, %c0_17] : memref<8x32xf32, #tpu.memory_space<vmem>>, vector<8x32xf32>
    tpu.vector_store %arg7[%c0_16, %c0_17], %35 {strides = array<i32>} : memref<8x32xf32, #tpu.memory_space<vmem>>, vector<8x32xf32>,
    return
  }
  func.func @transform_0(%arg0: i32) -> (i32, i32) {
    %c0_i32 = arith.constant 0 : i32
    %c0_i32_0 = arith.constant 0 : i32
    return %arg0, %c0_i32 : i32, i32
  }
  func.func @transform_1(%arg0: i32) -> (i32, i32) {
    %c0_i32 = arith.constant 0 : i32
    %c0_i32_0 = arith.constant 0 : i32
    return %arg0, %c0_i32 : i32, i32
  }
  func.func @transform_2(%arg0: i32) -> (i32, i32) {
    %c0_i32 = arith.constant 0 : i32
    %c0_i32_0 = arith.constant 0 : i32
    %c0_i32_1 = arith.constant 0 : i32
    return %c0_i32, %c0_i32_0 : i32, i32
  }
  func.func @transform_3(%arg0: i32) -> (i32, i32) {
    %c0_i32 = arith.constant 0 : i32
    %c0_i32_0 = arith.constant 0 : i32
    %c0_i32_1 = arith.constant 0 : i32
    return %c0_i32, %c0_i32_0 : i32, i32
  }
  func.func @transform_4(%arg0: i32) -> (i32, i32) {
    %c0_i32 = arith.constant 0 : i32
    %c0_i32_0 = arith.constant 0 : i32
    %c0_i32_1 = arith.constant 0 : i32
    return %c0_i32, %c0_i32_0 : i32, i32
  }
  func.func @transform_5(%arg0: i32) -> (i32, i32) {
    %c0_i32 = arith.constant 0 : i32
    %c0_i32_0 = arith.constant 0 : i32
    %c0_i32_1 = arith.constant 0 : i32
    return %c0_i32, %c0_i32_0 : i32, i32
  }
  func.func @transform_6(%arg0: i32) -> (i32, i32) {
    %c0_i32 = arith.constant 0 : i32
    %c0_i32_0 = arith.constant 0 : i32
    return %arg0, %c0_i32 : i32, i32
  }
}

module attributes {stable_mosaic.version = 11 : i64} {
  func.func @gru_v3_cell_kernel(%arg0: i32, %arg1: memref<8x16xf32, #tpu.memory_space<vmem>>, %arg2: memref<8x32xf32, #tpu.memory_space<vmem>>, %arg3: memref<16x96xf32, #tpu.memory_space<vmem>>, %arg4: memref<32x64xf32, #tpu.memory_space<vmem>>, %arg5: memref<32x32xf32, #tpu.memory_space<vmem>>, %arg6: memref<1x96xf32, #tpu.memory_space<vmem>>, %arg7: memref<8x32xf32, #tpu.memory_space<vmem>>) attributes {dimension_semantics = [#tpu.dimension_semantics<parallel>], iteration_bounds = array<i64: 1>, scalar_prefetch = 0 : i64, scratch_operands = 0 : i64, tpu.core_type = #tpu.core_type<tc>, window_params = [{transform_indices = @transform_0, window_bounds = array<i64: 8, 16>}, {transform_indices = @transform_1, window_bounds = array<i64: 8, 32>}, {pipeline_mode = #tpu.pipeline_mode<synchronous>, transform_indices = @transform_2, window_bounds = array<i64: 16, 96>}, {pipeline_mode = #tpu.pipeline_mode<synchronous>, transform_indices = @transform_3, window_bounds = array<i64: 32, 64>}, {pipeline_mode = #tpu.pipeline_mode<synchronous>, transform_indices = @transform_4, window_bounds = array<i64: 32, 32>}, {pipeline_mode = #tpu.pipeline_mode<synchronous>, transform_indices = @transform_5, window_bounds = array<i64: 1, 96>}, {transform_indices = @transform_6, window_bounds = array<i64: 8, 32>}]} {
    %c0 = arith.constant 0 : index
    %c0_0 = arith.constant 0 : index
    %0 = vector.load %arg1[%c0, %c0_0] : memref<8x16xf32, #tpu.memory_space<vmem>>, vector<8x16xf32>
    %c0_1 = arith.constant 0 : index
    %c0_2 = arith.constant 0 : index
    %1 = vector.load %arg2[%c0_1, %c0_2] : memref<8x32xf32, #tpu.memory_space<vmem>>, vector<8x32xf32>
    %c0_3 = arith.constant 0 : index
    %c0_4 = arith.constant 0 : index
    %2 = vector.load %arg3[%c0_3, %c0_4] : memref<16x96xf32, #tpu.memory_space<vmem>>, vector<16x96xf32>
    %cst = arith.constant dense<0.000000e+00> : vector<8x96xf32>
    %3 = tpu.matmul %0, %2, %cst {dimension_numbers = #tpu.dot_dimension_numbers<[1], [0], [0], [1], [0, 0, 1, 1], [], []>} : vector<8x16xf32>, vector<16x96xf32>, vector<8x96xf32> -> vector<8x96xf32>
    %c0_5 = arith.constant 0 : index
    %c0_6 = arith.constant 0 : index
    %4 = vector.load %arg6[%c0_5, %c0_6] : memref<1x96xf32, #tpu.memory_space<vmem>>, vector<1x96xf32>
    %5 = vector.broadcast %4 : vector<1x96xf32> to vector<8x96xf32>
    %6 = arith.addf %3, %5 : vector<8x96xf32>
    %c0_7 = arith.constant 0 : index
    %c0_8 = arith.constant 0 : index
    %7 = vector.load %arg4[%c0_7, %c0_8] : memref<32x64xf32, #tpu.memory_space<vmem>>, vector<32x64xf32>
    %cst_9 = arith.constant dense<0.000000e+00> : vector<8x64xf32>
    %8 = tpu.matmul %1, %7, %cst_9 {dimension_numbers = #tpu.dot_dimension_numbers<[1], [0], [0], [1], [0, 0, 1, 1], [], []>} : vector<8x32xf32>, vector<32x64xf32>, vector<8x64xf32> -> vector<8x64xf32>
    %9 = vector.extract_strided_slice %6 {offsets = [0, 0], sizes = [8, 32], strides = [1, 1]} : vector<8x96xf32> to vector<8x32xf32>
    %10 = vector.extract_strided_slice %8 {offsets = [0, 0], sizes = [8, 32], strides = [1, 1]} : vector<8x64xf32> to vector<8x32xf32>
    %11 = arith.addf %9, %10 : vector<8x32xf32>
    %12 = arith.negf %11 : vector<8x32xf32>
    %13 = math.exp %12 : vector<8x32xf32>
    %cst_10 = arith.constant 1.000000e+00 : f32
    %14 = vector.broadcast %cst_10 : f32 to vector<8x32xf32>
    %15 = arith.addf %14, %13 : vector<8x32xf32>
    %16 = arith.divf %14, %15 : vector<8x32xf32>
    %17 = vector.extract_strided_slice %6 {offsets = [0, 32], sizes = [8, 32], strides = [1, 1]} : vector<8x96xf32> to vector<8x32xf32>
    %18 = vector.extract_strided_slice %8 {offsets = [0, 32], sizes = [8, 32], strides = [1, 1]} : vector<8x64xf32> to vector<8x32xf32>
    %19 = arith.addf %17, %18 : vector<8x32xf32>
    %20 = arith.negf %19 : vector<8x32xf32>
    %21 = math.exp %20 : vector<8x32xf32>
    %cst_11 = arith.constant 1.000000e+00 : f32
    %22 = vector.broadcast %cst_11 : f32 to vector<8x32xf32>
    %23 = arith.addf %22, %21 : vector<8x32xf32>
    %24 = arith.divf %22, %23 : vector<8x32xf32>
    %25 = arith.mulf %16, %1 : vector<8x32xf32>
    %c0_12 = arith.constant 0 : index
    %c0_13 = arith.constant 0 : index
    %26 = vector.load %arg5[%c0_12, %c0_13] : memref<32x32xf32, #tpu.memory_space<vmem>>, vector<32x32xf32>
    %cst_14 = arith.constant dense<0.000000e+00> : vector<8x32xf32>
    %27 = tpu.matmul %25, %26, %cst_14 {dimension_numbers = #tpu.dot_dimension_numbers<[1], [0], [0], [1], [0, 0, 1, 1], [], []>} : vector<8x32xf32>, vector<32x32xf32>, vector<8x32xf32> -> vector<8x32xf32>
    %28 = vector.extract_strided_slice %6 {offsets = [0, 64], sizes = [8, 32], strides = [1, 1]} : vector<8x96xf32> to vector<8x32xf32>
    %29 = arith.addf %28, %27 : vector<8x32xf32>
    %30 = math.tanh %29 : vector<8x32xf32>
    %31 = arith.mulf %24, %1 : vector<8x32xf32>
    %cst_15 = arith.constant 1.000000e+00 : f32
    %32 = vector.broadcast %cst_15 : f32 to vector<8x32xf32>
    %33 = arith.subf %32, %24 : vector<8x32xf32>
    %34 = arith.mulf %33, %30 : vector<8x32xf32>
    %35 = arith.addf %31, %34 : vector<8x32xf32>
    %c0_16 = arith.constant 0 : index
    %c0_17 = arith.constant 0 : index
    %36 = vector.load %arg7[%c0_16, %c0_17] : memref<8x32xf32, #tpu.memory_space<vmem>>, vector<8x32xf32>
    tpu.vector_store %arg7[%c0_16, %c0_17], %35 {strides = array<i32>} : memref<8x32xf32, #tpu.memory_space<vmem>>, vector<8x32xf32>,
    return
  }
  func.func @transform_0(%arg0: i32) -> (i32, i32) {
    %c0_i32 = arith.constant 0 : i32
    %c0_i32_0 = arith.constant 0 : i32
    return %arg0, %c0_i32 : i32, i32
  }
  func.func @transform_1(%arg0: i32) -> (i32, i32) {
    %c0_i32 = arith.constant 0 : i32
    %c0_i32_0 = arith.constant 0 : i32
    return %arg0, %c0_i32 : i32, i32
  }
  func.func @transform_2(%arg0: i32) -> (i32, i32) {
    %c0_i32 = arith.constant 0 : i32
    %c0_i32_0 = arith.constant 0 : i32
    %c0_i32_1 = arith.constant 0 : i32
    return %c0_i32, %c0_i32_0 : i32, i32
  }
  func.func @transform_3(%arg0: i32) -> (i32, i32) {
    %c0_i32 = arith.constant 0 : i32
    %c0_i32_0 = arith.constant 0 : i32
    %c0_i32_1 = arith.constant 0 : i32
    return %c0_i32, %c0_i32_0 : i32, i32
  }
  func.func @transform_4(%arg0: i32) -> (i32, i32) {
    %c0_i32 = arith.constant 0 : i32
    %c0_i32_0 = arith.constant 0 : i32
    %c0_i32_1 = arith.constant 0 : i32
    return %c0_i32, %c0_i32_0 : i32, i32
  }
  func.func @transform_5(%arg0: i32) -> (i32, i32) {
    %c0_i32 = arith.constant 0 : i32
    %c0_i32_0 = arith.constant 0 : i32
    %c0_i32_1 = arith.constant 0 : i32
    return %c0_i32, %c0_i32_0 : i32, i32
  }
  func.func @transform_6(%arg0: i32) -> (i32, i32) {
    %c0_i32 = arith.constant 0 : i32
    %c0_i32_0 = arith.constant 0 : i32
    return %arg0, %c0_i32 : i32, i32
  }
}

</mosaic_0001>

<llo_original>
// kernel: tpu_custom_call.1
$region0: #{tpu_custom_call.1}
  #allocation0 [shape = 'u32[]', space=smem, size = 0x4, offset = 0x4, fixed_abs, tag = 'smem constant byte address 0x4 - core index']
  #allocation1 [shape = 'u32[144,128]{1,0:T(1,128)}', space=vmem, size = 0x12000, scoped, tag = 'internal scratch']
  %s0 = inlined_call_operand.hbm [shape: f32[8,16], index: 0, kind: input, shape index: {}]
  %s1 = inlined_call_operand.hbm [shape: f32[8,32], index: 1, kind: input, shape index: {}]
  %s2 = inlined_call_operand.hbm [shape: f32[16,96], index: 2, kind: input, shape index: {}]
  %s3 = inlined_call_operand.hbm [shape: f32[32,64], index: 3, kind: input, shape index: {}]
  %s4 = inlined_call_operand.hbm [shape: f32[32,32], index: 4, kind: input, shape index: {}]
  %s5 = inlined_call_operand.vmem [shape: f32[1,96], index: 5, kind: input, shape index: {}]
  %s6 = inlined_call_operand.hbm [shape: f32[8,32], index: 6, kind: output, shape index: {}]
  %s7 = sld [smem:[#allocation0]]
  $region54: #{tpu_custom_call.1} parent=0
    _
  %s9 = ssub.s32 1, %s7
  %s10 = scalar_select 0, %s9, %s7
  $region1: #{tpu_custom_call.1} parent=0
    #allocation2 [shape = 'u8[4096]{0}', space=vmem, size = 0x1000, scoped, tag = 'input window, operand 0, single buffered']
    #allocation3 [shape = 's32[1]{0}', space=sflag, size = 0x4, scoped, tag = 'scoped memory for tpu_custom_call.1']
    #allocation4 [shape = 's32[1]{0}', space=sflag, size = 0x4, scoped, tag = 'scoped memory for tpu_custom_call.1']
    #allocation5 [shape = 'u8[4096]{0}', space=vmem, size = 0x1000, scoped, tag = 'input window, operand 1, single buffered']
    #allocation6 [shape = 's32[1]{0}', space=sflag, size = 0x4, scoped, tag = 'scoped memory for tpu_custom_call.1']
    #allocation7 [shape = 'u8[8192]{0}', space=vmem, size = 0x2000, scoped, tag = 'input window, operand 2, single buffered']
    #allocation8 [shape = 'u8[16384]{0}', space=vmem, size = 0x4000, scoped, tag = 'input window, operand 3, single buffered']
    #allocation9 [shape = 's32[1]{0}', space=sflag, size = 0x4, scoped, tag = 'scoped memory for tpu_custom_call.1']
    #allocation10 [shape = 'u8[16384]{0}', space=vmem, size = 0x4000, scoped, tag = 'input window, operand 4, single buffered']
    #allocation11 [shape = 'u8[4096]{0}', space=vmem, size = 0x1000, scoped, tag = 'output window, operand 0, single buffered']
    %11 = vsyncpa [#allocation3], 0
    %12 = vsyncpa [#allocation6], 0
    %13 = vsyncpa [#allocation9], 0
    %14 = vsyncpa [#allocation4], 0
    // Predicated region
    $region2: #{tpu_custom_call.1} parent=1 // pred_check
      _
    $region3: #{tpu_custom_call.1} parent=1 // pred_check_branch
      %16 = sbr.rel (0) target = $region5
    $region4: #{tpu_custom_call.1} parent=1 // pred_region
      %s18 = ssub.s32 128, 128
      %19 = vsyncadd [#allocation3], %s18
      %s21 = sshll.u32 [#allocation2], 4
      %s22 = int_to_ptr.vmem [resolvable:$true] %s21
      %24 = dma.hbm_to_vmem [thread:$0]  %s0, 128, %s22, [#allocation3]
    $region5: #{tpu_custom_call.1} parent=1 // pred_fallthru
      _
    // Predicated region
    $region6: #{tpu_custom_call.1} parent=1 // pred_check
      _
    $region7: #{tpu_custom_call.1} parent=1 // pred_check_branch
      %26 = sbr.rel (0) target = $region9
    $region8: #{tpu_custom_call.1} parent=1 // pred_region
      %s28 = ssub.s32 128, 128
      %29 = vsyncadd [#allocation6], %s28
      %s31 = sshll.u32 [#allocation5], 4
      %s32 = int_to_ptr.vmem [resolvable:$true] %s31
      %34 = dma.hbm_to_vmem [thread:$0]  %s1, 128, %s32, [#allocation6]
    $region9: #{tpu_custom_call.1} parent=1 // pred_fallthru
      _
    // Predicated region
    $region10: #{tpu_custom_call.1} parent=1 // pred_check
      _
    $region11: #{tpu_custom_call.1} parent=1 // pred_check_branch
      %36 = sbr.rel (0) target = $region13
    $region12: #{tpu_custom_call.1} parent=1 // pred_region
      %s38 = ssub.s32 256, 256
      %39 = vsyncadd [#allocation6], %s38
      %s40 = sshll.u32 [#allocation7], 4
      %s41 = int_to_ptr.vmem [resolvable:$true] %s40
      %46 = dma.hbm_to_vmem [thread:$0]  %s2, 256, %s41, [#allocation6], 128, 128, 8
    $region13: #{tpu_custom_call.1} parent=1 // pred_fallthru
      _
    // Predicated region
    $region14: #{tpu_custom_call.1} parent=1 // pred_check
      _
    $region15: #{tpu_custom_call.1} parent=1 // pred_check_branch
      %48 = sbr.rel (0) target = $region17
    $region16: #{tpu_custom_call.1} parent=1 // pred_region
      %s50 = ssub.s32 512, 512
      %51 = vsyncadd [#allocation9], %s50
      %s52 = sshll.u32 [#allocation8], 4
      %s53 = int_to_ptr.vmem [resolvable:$true] %s52
      %58 = dma.hbm_to_vmem [thread:$0]  %s3, 512, %s53, [#allocation9], 128, 128, 8
    $region17: #{tpu_custom_call.1} parent=1 // pred_fallthru
      _
    // Predicated region
    $region18: #{tpu_custom_call.1} parent=1 // pred_check
      _
    $region19: #{tpu_custom_call.1} parent=1 // pred_check_branch
      %60 = sbr.rel (0) target = $region21
    $region20: #{tpu_custom_call.1} parent=1 // pred_region
      %s62 = ssub.s32 512, 512
      %63 = vsyncadd [#allocation9], %s62
      %s64 = sshll.u32 [#allocation10], 4
      %s65 = int_to_ptr.vmem [resolvable:$true] %s64
      %70 = dma.hbm_to_vmem [thread:$0]  %s4, 512, %s65, [#allocation9], 128, 128, 8
    $region21: #{tpu_custom_call.1} parent=1 // pred_fallthru
      _
    // Predicated region
    $region22: #{tpu_custom_call.1} parent=1 // pred_check
      _
    $region23: #{tpu_custom_call.1} parent=1 // pred_check_branch
      %72 = sbr.rel (0) target = $region25
    $region24: #{tpu_custom_call.1} parent=1 // pred_region
      _
    $region25: #{tpu_custom_call.1} parent=1 // pred_fallthru
      _
    // Predicated region
    $region26: #{tpu_custom_call.1} parent=1 // pred_check
      _
    $region27: #{tpu_custom_call.1} parent=1 // pred_check_branch
      %74 = sbr.rel (0) target = $region29
    $region28: #{tpu_custom_call.1} parent=1 // pred_region
      %75 = dma.done [#allocation3], 128
    $region29: #{tpu_custom_call.1} parent=1 // pred_fallthru
      _
    // Predicated region
    $region30: #{tpu_custom_call.1} parent=1 // pred_check
      _
    $region31: #{tpu_custom_call.1} parent=1 // pred_check_branch
      %77 = sbr.rel (0) target = $region33
    $region32: #{tpu_custom_call.1} parent=1 // pred_region
      %78 = dma.done [#allocation6], 128
    $region33: #{tpu_custom_call.1} parent=1 // pred_fallthru
      _
    // Predicated region
    $region34: #{tpu_custom_call.1} parent=1 // pred_check
      _
    $region35: #{tpu_custom_call.1} parent=1 // pred_check_branch
      %80 = sbr.rel (0) target = $region37
    $region36: #{tpu_custom_call.1} parent=1 // pred_region
      %81 = dma.done [#allocation6], 256
    $region37: #{tpu_custom_call.1} parent=1 // pred_fallthru
      _
    // Predicated region
    $region38: #{tpu_custom_call.1} parent=1 // pred_check
      _
    $region39: #{tpu_custom_call.1} parent=1 // pred_check_branch
      %83 = sbr.rel (0) target = $region41
    $region40: #{tpu_custom_call.1} parent=1 // pred_region
      %84 = dma.done [#allocation9], 512
    $region41: #{tpu_custom_call.1} parent=1 // pred_fallthru
      _
    // Predicated region
    $region42: #{tpu_custom_call.1} parent=1 // pred_check
      _
    $region43: #{tpu_custom_call.1} parent=1 // pred_check_branch
      %86 = sbr.rel (0) target = $region45
    $region44: #{tpu_custom_call.1} parent=1 // pred_region
      %87 = dma.done [#allocation9], 512
    $region45: #{tpu_custom_call.1} parent=1 // pred_fallthru
      _
    %v88 = vld [vmem:[#allocation2] sm:$0xff]
    %v89 = vld [vmem:[#allocation5] sm:$0xff]
    %v90 = vld [vmem:[#allocation7] sm:$0xff]
    %v91 = vld [vmem:[#allocation7 + $0x8] sm:$0xff]
    %v92 = vld [vmem:[%s5] sm:$0x1]
    %v94 = vlaneseq
    %v95 = vshrl.u32 %v94, 7
    %v96 = vsub.s32 0, %v95
    %v97 = vrot.slane %v92, %v96
    %vm99 = vcmask 130048
    %v101 = vsel %vm99, %v88, 0
    %103 = vmatprep.subr.mxu0 0.0
    %104 = vmatpush1.msra.mxu0 %v90
    %105 = vmatprep.subr.mxu0 0.0
    %106 = vmatpush1.msra.mxu0 %v91
    %107 = vmatprep.subr.mxu0 0.0
    %108 = vmatpush1.msra.mxu0 0.0
    %109 = vmatprep.subr.mxu0 0.0
    %110 = vmatpush1.msra.mxu0 0.0
    %111 = vmatprep.subr.mxu0 0.0
    %112 = vmatpush1.msra.mxu0 0.0
    %113 = vmatprep.subr.mxu0 0.0
    %114 = vmatpush1.msra.mxu0 0.0
    %115 = vmatprep.subr.mxu0 0.0
    %116 = vmatpush1.msra.mxu0 0.0
    %117 = vmatprep.subr.mxu0 0.0
    %118 = vmatpush1.msra.mxu0 0.0
    %119 = vmatprep.subr.mxu0 0.0
    %120 = vmatpush1.msra.mxu0 0.0
    %121 = vmatprep.subr.mxu0 0.0
    %122 = vmatpush1.msra.mxu0 0.0
    %123 = vmatprep.subr.mxu0 0.0
    %124 = vmatpush1.msra.mxu0 0.0
    %125 = vmatprep.subr.mxu0 0.0
    %126 = vmatpush1.msra.mxu0 0.0
    %127 = vmatprep.subr.mxu0 0.0
    %128 = vmatpush1.msra.mxu0 0.0
    %129 = vmatprep.subr.mxu0 0.0
    %130 = vmatpush1.msra.mxu0 0.0
    %131 = vmatprep.subr.mxu0 0.0
    %132 = vmatpush1.msra.mxu0 0.0
    %133 = vmatprep.subr.mxu0 0.0
    %134 = vmatpush1.msra.mxu0 0.0
    %135 = vmatprep.subr.mxu0 0.0
    %136 = vmatpush1.msra.mxu0 0.0
    %137 = vmatprep.subr.mxu0 0.0
    %138 = vmatpush1.msra.mxu0 0.0
    %139 = vmatprep.subr.mxu0 0.0
    %140 = vmatpush1.msra.mxu0 0.0
    %141 = vmatprep.subr.mxu0 0.0
    %142 = vmatpush1.msra.mxu0 0.0
    %143 = vmatprep.subr.mxu0 0.0
    %144 = vmatpush1.msra.mxu0 0.0
    %145 = vmatprep.subr.mxu0 0.0
    %146 = vmatpush1.msra.mxu0 0.0
    %147 = vmatprep.subr.mxu0 0.0
    %148 = vmatpush1.msra.mxu0 0.0
    %149 = vmatprep.subr.mxu0 0.0
    %150 = vmatpush1.msra.mxu0 0.0
    %151 = vmatprep.subr.mxu0 0.0
    %152 = vmatpush1.msra.mxu0 0.0
    %153 = vmatprep.subr.mxu0 0.0
    %154 = vmatpush1.msra.mxu0 0.0
    %155 = vmatprep.subr.mxu0 0.0
    %156 = vmatpush1.msra.mxu0 0.0
    %157 = vmatprep.subr.mxu0 0.0
    %158 = vmatpush1.msra.mxu0 0.0
    %159 = vmatprep.subr.mxu0 0.0
    %160 = vmatpush1.msra.mxu0 0.0
    %161 = vmatprep.subr.mxu0 0.0
    %162 = vmatpush1.msra.mxu0 0.0
    %163 = vmatprep.subr.mxu0 0.0
    %164 = vmatpush1.msra.mxu0 0.0
    %165 = vmatprep.subr.mxu0 0.0
    %166 = vmatpush1.msra.mxu0 0.0
    %167 = vmatprep.mubr.f32.mxu0 0.0
    %168 = vmatmul.mubr.f32.gmra.mrb[0].mxu0 %v101
    %v169 = vpop.f32.mrb[0].mxu0
    %v170 = vadd.f32 %v97, %v169
    %v171 = vpop.f32.mrb[0].mxu0
    %172 = vdwg.mxu0
    %v173 = vld [vmem:[#allocation8] sm:$0xff]
    %v174 = vld [vmem:[#allocation8 + $0x8] sm:$0xff]
    %v175 = vld [vmem:[#allocation8 + $0x10] sm:$0xff]
    %v176 = vld [vmem:[#allocation8 + $0x18] sm:$0xff]
    %vm177 = vcmask 261120
    %v179 = vsel %vm177, %v89, 0
    %181 = vmatprep.subr.mxu0 0.0
    %182 = vmatpush1.msra.mxu0 %v173
    %183 = vmatprep.subr.mxu0 0.0
    %184 = vmatpush1.msra.mxu0 %v174
    %185 = vmatprep.subr.mxu0 0.0
    %186 = vmatpush1.msra.mxu0 %v175
    %187 = vmatprep.subr.mxu0 0.0
    %188 = vmatpush1.msra.mxu0 %v176
    %189 = vmatprep.subr.mxu0 0.0
    %190 = vmatpush1.msra.mxu0 0.0
    %191 = vmatprep.subr.mxu0 0.0
    %192 = vmatpush1.msra.mxu0 0.0
    %193 = vmatprep.subr.mxu0 0.0
    %194 = vmatpush1.msra.mxu0 0.0
    %195 = vmatprep.subr.mxu0 0.0
    %196 = vmatpush1.msra.mxu0 0.0
    %197 = vmatprep.subr.mxu0 0.0
    %198 = vmatpush1.msra.mxu0 0.0
    %199 = vmatprep.subr.mxu0 0.0
    %200 = vmatpush1.msra.mxu0 0.0
    %201 = vmatprep.subr.mxu0 0.0
    %202 = vmatpush1.msra.mxu0 0.0
    %203 = vmatprep.subr.mxu0 0.0
    %204 = vmatpush1.msra.mxu0 0.0
    %205 = vmatprep.subr.mxu0 0.0
    %206 = vmatpush1.msra.mxu0 0.0
    %207 = vmatprep.subr.mxu0 0.0
    %208 = vmatpush1.msra.mxu0 0.0
    %209 = vmatprep.subr.mxu0 0.0
    %210 = vmatpush1.msra.mxu0 0.0
    %211 = vmatprep.subr.mxu0 0.0
    %212 = vmatpush1.msra.mxu0 0.0
    %213 = vmatprep.subr.mxu0 0.0
    %214 = vmatpush1.msra.mxu0 0.0
    %215 = vmatprep.subr.mxu0 0.0
    %216 = vmatpush1.msra.mxu0 0.0
    %217 = vmatprep.subr.mxu0 0.0
    %218 = vmatpush1.msra.mxu0 0.0
    %219 = vmatprep.subr.mxu0 0.0
    %220 = vmatpush1.msra.mxu0 0.0
    %221 = vmatprep.subr.mxu0 0.0
    %222 = vmatpush1.msra.mxu0 0.0
    %223 = vmatprep.subr.mxu0 0.0
    %224 = vmatpush1.msra.mxu0 0.0
    %225 = vmatprep.subr.mxu0 0.0
    %226 = vmatpush1.msra.mxu0 0.0
    %227 = vmatprep.subr.mxu0 0.0
    %228 = vmatpush1.msra.mxu0 0.0
    %229 = vmatprep.subr.mxu0 0.0
    %230 = vmatpush1.msra.mxu0 0.0
    %231 = vmatprep.subr.mxu0 0.0
    %232 = vmatpush1.msra.mxu0 0.0
    %233 = vmatprep.subr.mxu0 0.0
    %234 = vmatpush1.msra.mxu0 0.0
    %235 = vmatprep.subr.mxu0 0.0
    %236 = vmatpush1.msra.mxu0 0.0
    %237 = vmatprep.subr.mxu0 0.0
    %238 = vmatpush1.msra.mxu0 0.0
    %239 = vmatprep.subr.mxu0 0.0
    %240 = vmatpush1.msra.mxu0 0.0
    %241 = vmatprep.subr.mxu0 0.0
    %242 = vmatpush1.msra.mxu0 0.0
    %243 = vmatprep.subr.mxu0 0.0
    %244 = vmatpush1.msra.mxu0 0.0
    %245 = vmatprep.mubr.f32.mxu0 0.0
    %246 = vmatmul.mubr.f32.gmra.mrb[0].mxu0 %v179
    %v247 = vpop.f32.mrb[0].mxu0
    %v248 = vadd.f32 0.0, %v247
    %v249 = vpop.f32.mrb[0].mxu0
    %250 = vdwg.mxu0
    %v251 = vadd.f32 %v170, %v248
    %v252 = vxor.u32 %v251, 2147483648
    %v253 = vmul.f32 %v252, 1.442695
    %v254 = vpow.pop %v253
    %v255 = vadd.f32 %v254, 1.0
    %v256 = vrcp.pop %v255
    %v257 = vmul.f32 1.0, %v256
    %v258 = vmul.f32 %v257, %v89
    %v259 = vld [vmem:[#allocation10] sm:$0xff]
    %v260 = vld [vmem:[#allocation10 + $0x8] sm:$0xff]
    %v261 = vld [vmem:[#allocation10 + $0x10] sm:$0xff]
    %v262 = vld [vmem:[#allocation10 + $0x18] sm:$0xff]
    %v264 = vsel %vm177, %v258, 0
    %266 = vmatprep.subr.mxu0 0.0
    %267 = vmatpush1.msra.mxu0 %v259
    %268 = vmatprep.subr.mxu0 0.0
    %269 = vmatpush1.msra.mxu0 %v260
    %270 = vmatprep.subr.mxu0 0.0
    %271 = vmatpush1.msra.mxu0 %v261
    %272 = vmatprep.subr.mxu0 0.0
    %273 = vmatpush1.msra.mxu0 %v262
    %274 = vmatprep.subr.mxu0 0.0
    %275 = vmatpush1.msra.mxu0 0.0
    %276 = vmatprep.subr.mxu0 0.0
    %277 = vmatpush1.msra.mxu0 0.0
    %278 = vmatprep.subr.mxu0 0.0
    %279 = vmatpush1.msra.mxu0 0.0
    %280 = vmatprep.subr.mxu0 0.0
    %281 = vmatpush1.msra.mxu0 0.0
    %282 = vmatprep.subr.mxu0 0.0
    %283 = vmatpush1.msra.mxu0 0.0
    %284 = vmatprep.subr.mxu0 0.0
    %285 = vmatpush1.msra.mxu0 0.0
    %286 = vmatprep.subr.mxu0 0.0
    %287 = vmatpush1.msra.mxu0 0.0
    %288 = vmatprep.subr.mxu0 0.0
    %289 = vmatpush1.msra.mxu0 0.0
    %290 = vmatprep.subr.mxu0 0.0
    %291 = vmatpush1.msra.mxu0 0.0
    %292 = vmatprep.subr.mxu0 0.0
    %293 = vmatpush1.msra.mxu0 0.0
    %294 = vmatprep.subr.mxu0 0.0
    %295 = vmatpush1.msra.mxu0 0.0
    %296 = vmatprep.subr.mxu0 0.0
    %297 = vmatpush1.msra.mxu0 0.0
    %298 = vmatprep.subr.mxu0 0.0
    %299 = vmatpush1.msra.mxu0 0.0
    %300 = vmatprep.subr.mxu0 0.0
    %301 = vmatpush1.msra.mxu0 0.0
    %302 = vmatprep.subr.mxu0 0.0
    %303 = vmatpush1.msra.mxu0 0.0
    %304 = vmatprep.subr.mxu0 0.0
    %305 = vmatpush1.msra.mxu0 0.0
    %306 = vmatprep.subr.mxu0 0.0
    %307 = vmatpush1.msra.mxu0 0.0
    %308 = vmatprep.subr.mxu0 0.0
    %309 = vmatpush1.msra.mxu0 0.0
    %310 = vmatprep.subr.mxu0 0.0
    %311 = vmatpush1.msra.mxu0 0.0
    %312 = vmatprep.subr.mxu0 0.0
    %313 = vmatpush1.msra.mxu0 0.0
    %314 = vmatprep.subr.mxu0 0.0
    %315 = vmatpush1.msra.mxu0 0.0
    %316 = vmatprep.subr.mxu0 0.0
    %317 = vmatpush1.msra.mxu0 0.0
    %318 = vmatprep.subr.mxu0 0.0
    %319 = vmatpush1.msra.mxu0 0.0
    %320 = vmatprep.subr.mxu0 0.0
    %321 = vmatpush1.msra.mxu0 0.0
    %322 = vmatprep.subr.mxu0 0.0
    %323 = vmatpush1.msra.mxu0 0.0
    %324 = vmatprep.subr.mxu0 0.0
    %325 = vmatpush1.msra.mxu0 0.0
    %326 = vmatprep.subr.mxu0 0.0
    %327 = vmatpush1.msra.mxu0 0.0
    %328 = vmatprep.subr.mxu0 0.0
    %329 = vmatpush1.msra.mxu0 0.0
    %330 = vmatprep.mubr.f32.mxu0 0.0
    %331 = vmatmul.mubr.f32.gmra.mrb[0].mxu0 %v264
    %v332 = vpop.f32.mrb[0].mxu0
    %v333 = vadd.f32 0.0, %v332
    %v334 = vpop.f32.mrb[0].mxu0
    %335 = vdwg.mxu0
    %337 = vrot.lane.b32.xlu0 %v333, 64
    %v338 = vpop.permute.xlu0 %337
    %v340 = vadd.f32 %v170, %v338
    %v341 = vtanh.pop %v340
    %342 = vrot.lane.b32.xlu0 %v89, 32
    %v343 = vpop.permute.xlu0 %342
    %v345 = vmul.f32 %v257, %v343
    %v346 = vsub.f32 1.0, %v257
    %348 = vrot.lane.b32.xlu0 %v341, 96
    %v349 = vpop.permute.xlu0 %348
    %v351 = vmul.f32 %v346, %v349
    %v352 = vadd.f32 %v345, %v351
    %354 = vrot.lane.b32.xlu0 %v352, 96
    %v355 = vpop.permute.xlu0 %354
    %357 = vst.msk [vmem:[#allocation11] sm:$0xff] %vm177, %v355
    // Predicated region
    $region46: #{tpu_custom_call.1} parent=1 // pred_check
      _
    $region47: #{tpu_custom_call.1} parent=1 // pred_check_branch
      %359 = sbr.rel (0) target = $region49
    $region48: #{tpu_custom_call.1} parent=1 // pred_region
      %s361 = ssub.s32 128, 128
      %362 = vsyncadd [#allocation4], %s361
      %s364 = sshll.u32 [#allocation11], 4
      %s365 = int_to_ptr.vmem [resolvable:$true] %s364
      %367 = dma.vmem_to_hbm [thread:$0]  %s365, 128, %s6, [#allocation4]
    $region49: #{tpu_custom_call.1} parent=1 // pred_fallthru
      _
    // Predicated region
    $region50: #{tpu_custom_call.1} parent=1 // pred_check
      _
    $region51: #{tpu_custom_call.1} parent=1 // pred_check_branch
      %369 = sbr.rel (0) target = $region53
    $region52: #{tpu_custom_call.1} parent=1 // pred_region
      %370 = dma.done [#allocation4], 128
    $region53: #{tpu_custom_call.1} parent=1 // pred_fallthru
      _
    %371 = vsyncpa [#allocation3], 1
    %372 = vsyncpa [#allocation6], 1
    %373 = vsyncpa [#allocation9], 1
    %374 = vsyncpa [#allocation4], 1

// kernel: tpu_custom_call.1
$region0: #{tpu_custom_call.1}
  #allocation0 [shape = 'u32[]', space=smem, size = 0x4, offset = 0x4, fixed_abs, tag = 'smem constant byte address 0x4 - core index']
  #allocation1 [shape = 'u32[144,128]{1,0:T(1,128)}', space=vmem, size = 0x12000, scoped, tag = 'internal scratch']
  %s0 = inlined_call_operand.hbm [shape: f32[8,16], index: 0, kind: input, shape index: {}]
  %s1 = inlined_call_operand.hbm [shape: f32[8,32], index: 1, kind: input, shape index: {}]
  %s2 = inlined_call_operand.hbm [shape: f32[16,96], index: 2, kind: input, shape index: {}]
  %s3 = inlined_call_operand.hbm [shape: f32[32,64], index: 3, kind: input, shape index: {}]
  %s4 = inlined_call_operand.hbm [shape: f32[32,32], index: 4, kind: input, shape index: {}]
  %s5 = inlined_call_operand.vmem [shape: f32[1,96], index: 5, kind: input, shape index: {}]
  %s6 = inlined_call_operand.hbm [shape: f32[8,32], index: 6, kind: output, shape index: {}]
  %s7 = sld [smem:[#allocation0]]
  $region54: #{tpu_custom_call.1} parent=0
    _
  %s9 = ssub.s32 1, %s7
  %s10 = scalar_select 0, %s9, %s7
  $region1: #{tpu_custom_call.1} parent=0
    #allocation2 [shape = 'u8[4096]{0}', space=vmem, size = 0x1000, scoped, tag = 'input window, operand 0, single buffered']
    #allocation3 [shape = 's32[1]{0}', space=sflag, size = 0x4, scoped, tag = 'scoped memory for tpu_custom_call.1']
    #allocation4 [shape = 's32[1]{0}', space=sflag, size = 0x4, scoped, tag = 'scoped memory for tpu_custom_call.1']
    #allocation5 [shape = 'u8[4096]{0}', space=vmem, size = 0x1000, scoped, tag = 'input window, operand 1, single buffered']
    #allocation6 [shape = 's32[1]{0}', space=sflag, size = 0x4, scoped, tag = 'scoped memory for tpu_custom_call.1']
    #allocation7 [shape = 'u8[8192]{0}', space=vmem, size = 0x2000, scoped, tag = 'input window, operand 2, single buffered']
    #allocation8 [shape = 'u8[16384]{0}', space=vmem, size = 0x4000, scoped, tag = 'input window, operand 3, single buffered']
    #allocation9 [shape = 's32[1]{0}', space=sflag, size = 0x4, scoped, tag = 'scoped memory for tpu_custom_call.1']
    #allocation10 [shape = 'u8[16384]{0}', space=vmem, size = 0x4000, scoped, tag = 'input window, operand 4, single buffered']
    #allocation11 [shape = 'u8[4096]{0}', space=vmem, size = 0x1000, scoped, tag = 'output window, operand 0, single buffered']
    %11 = vsyncpa [#allocation3], 0
    %12 = vsyncpa [#allocation6], 0
    %13 = vsyncpa [#allocation9], 0
    %14 = vsyncpa [#allocation4], 0
    // Predicated region
    $region2: #{tpu_custom_call.1} parent=1 // pred_check
      _
    $region3: #{tpu_custom_call.1} parent=1 // pred_check_branch
      %16 = sbr.rel (0) target = $region5
    $region4: #{tpu_custom_call.1} parent=1 // pred_region
      %s18 = ssub.s32 128, 128
      %19 = vsyncadd [#allocation3], %s18
      %s21 = sshll.u32 [#allocation2], 4
      %s22 = int_to_ptr.vmem [resolvable:$true] %s21
      %24 = dma.hbm_to_vmem [thread:$0]  %s0, 128, %s22, [#allocation3]
    $region5: #{tpu_custom_call.1} parent=1 // pred_fallthru
      _
    // Predicated region
    $region6: #{tpu_custom_call.1} parent=1 // pred_check
      _
    $region7: #{tpu_custom_call.1} parent=1 // pred_check_branch
      %26 = sbr.rel (0) target = $region9
    $region8: #{tpu_custom_call.1} parent=1 // pred_region
      %s28 = ssub.s32 128, 128
      %29 = vsyncadd [#allocation6], %s28
      %s31 = sshll.u32 [#allocation5], 4
      %s32 = int_to_ptr.vmem [resolvable:$true] %s31
      %34 = dma.hbm_to_vmem [thread:$0]  %s1, 128, %s32, [#allocation6]
    $region9: #{tpu_custom_call.1} parent=1 // pred_fallthru
      _
    // Predicated region
    $region10: #{tpu_custom_call.1} parent=1 // pred_check
      _
    $region11: #{tpu_custom_call.1} parent=1 // pred_check_branch
      %36 = sbr.rel (0) target = $region13
    $region12: #{tpu_custom_call.1} parent=1 // pred_region
      %s38 = ssub.s32 256, 256
      %39 = vsyncadd [#allocation6], %s38
      %s40 = sshll.u32 [#allocation7], 4
      %s41 = int_to_ptr.vmem [resolvable:$true] %s40
      %46 = dma.hbm_to_vmem [thread:$0]  %s2, 256, %s41, [#allocation6], 128, 128, 8
    $region13: #{tpu_custom_call.1} parent=1 // pred_fallthru
      _
    // Predicated region
    $region14: #{tpu_custom_call.1} parent=1 // pred_check
      _
    $region15: #{tpu_custom_call.1} parent=1 // pred_check_branch
      %48 = sbr.rel (0) target = $region17
    $region16: #{tpu_custom_call.1} parent=1 // pred_region
      %s50 = ssub.s32 512, 512
      %51 = vsyncadd [#allocation9], %s50
      %s52 = sshll.u32 [#allocation8], 4
      %s53 = int_to_ptr.vmem [resolvable:$true] %s52
      %58 = dma.hbm_to_vmem [thread:$0]  %s3, 512, %s53, [#allocation9], 128, 128, 8
    $region17: #{tpu_custom_call.1} parent=1 // pred_fallthru
      _
    // Predicated region
    $region18: #{tpu_custom_call.1} parent=1 // pred_check
      _
    $region19: #{tpu_custom_call.1} parent=1 // pred_check_branch
      %60 = sbr.rel (0) target = $region21
    $region20: #{tpu_custom_call.1} parent=1 // pred_region
      %s62 = ssub.s32 512, 512
      %63 = vsyncadd [#allocation9], %s62
      %s64 = sshll.u32 [#allocation10], 4
      %s65 = int_to_ptr.vmem [resolvable:$true] %s64
      %70 = dma.hbm_to_vmem [thread:$0]  %s4, 512, %s65, [#allocation9], 128, 128, 8
    $region21: #{tpu_custom_call.1} parent=1 // pred_fallthru
      _
    // Predicated region
    $region22: #{tpu_custom_call.1} parent=1 // pred_check
      _
    $region23: #{tpu_custom_call.1} parent=1 // pred_check_branch
      %72 = sbr.rel (0) target = $region25
    $region24: #{tpu_custom_call.1} parent=1 // pred_region
      _
    $region25: #{tpu_custom_call.1} parent=1 // pred_fallthru
      _
    // Predicated region
    $region26: #{tpu_custom_call.1} parent=1 // pred_check
      _
    $region27: #{tpu_custom_call.1} parent=1 // pred_check_branch
      %74 = sbr.rel (0) target = $region29
    $region28: #{tpu_custom_call.1} parent=1 // pred_region
      %75 = dma.done [#allocation3], 128
    $region29: #{tpu_custom_call.1} parent=1 // pred_fallthru
      _
    // Predicated region
    $region30: #{tpu_custom_call.1} parent=1 // pred_check
      _
    $region31: #{tpu_custom_call.1} parent=1 // pred_check_branch
      %77 = sbr.rel (0) target = $region33
    $region32: #{tpu_custom_call.1} parent=1 // pred_region
      %78 = dma.done [#allocation6], 128
    $region33: #{tpu_custom_call.1} parent=1 // pred_fallthru
      _
    // Predicated region
    $region34: #{tpu_custom_call.1} parent=1 // pred_check
      _
    $region35: #{tpu_custom_call.1} parent=1 // pred_check_branch
      %80 = sbr.rel (0) target = $region37
    $region36: #{tpu_custom_call.1} parent=1 // pred_region
      %81 = dma.done [#allocation6], 256
    $region37: #{tpu_custom_call.1} parent=1 // pred_fallthru
      _
    // Predicated region
    $region38: #{tpu_custom_call.1} parent=1 // pred_check
      _
    $region39: #{tpu_custom_call.1} parent=1 // pred_check_branch
      %83 = sbr.rel (0) target = $region41
    $region40: #{tpu_custom_call.1} parent=1 // pred_region
      %84 = dma.done [#allocation9], 512
    $region41: #{tpu_custom_call.1} parent=1 // pred_fallthru
      _
    // Predicated region
    $region42: #{tpu_custom_call.1} parent=1 // pred_check
      _
    $region43: #{tpu_custom_call.1} parent=1 // pred_check_branch
      %86 = sbr.rel (0) target = $region45
    $region44: #{tpu_custom_call.1} parent=1 // pred_region
      %87 = dma.done [#allocation9], 512
    $region45: #{tpu_custom_call.1} parent=1 // pred_fallthru
      _
    %v88 = vld [vmem:[#allocation2] sm:$0xff]
    %v89 = vld [vmem:[#allocation5] sm:$0xff]
    %v90 = vld [vmem:[#allocation7] sm:$0xff]
    %v91 = vld [vmem:[#allocation7 + $0x8] sm:$0xff]
    %v92 = vld [vmem:[%s5] sm:$0x1]
    %v94 = vlaneseq
    %v95 = vshrl.u32 %v94, 7
    %v96 = vsub.s32 0, %v95
    %v97 = vrot.slane %v92, %v96
    %vm99 = vcmask 130048
    %v101 = vsel %vm99, %v88, 0
    %103 = vmatprep.subr.mxu0 0.0
    %104 = vmatpush1.msra.mxu0 %v90
    %105 = vmatprep.subr.mxu0 0.0
    %106 = vmatpush1.msra.mxu0 %v91
    %107 = vmatprep.subr.mxu0 0.0
    %108 = vmatpush1.msra.mxu0 0.0
    %109 = vmatprep.subr.mxu0 0.0
    %110 = vmatpush1.msra.mxu0 0.0
    %111 = vmatprep.subr.mxu0 0.0
    %112 = vmatpush1.msra.mxu0 0.0
    %113 = vmatprep.subr.mxu0 0.0
    %114 = vmatpush1.msra.mxu0 0.0
    %115 = vmatprep.subr.mxu0 0.0
    %116 = vmatpush1.msra.mxu0 0.0
    %117 = vmatprep.subr.mxu0 0.0
    %118 = vmatpush1.msra.mxu0 0.0
    %119 = vmatprep.subr.mxu0 0.0
    %120 = vmatpush1.msra.mxu0 0.0
    %121 = vmatprep.subr.mxu0 0.0
    %122 = vmatpush1.msra.mxu0 0.0
    %123 = vmatprep.subr.mxu0 0.0
    %124 = vmatpush1.msra.mxu0 0.0
    %125 = vmatprep.subr.mxu0 0.0
    %126 = vmatpush1.msra.mxu0 0.0
    %127 = vmatprep.subr.mxu0 0.0
    %128 = vmatpush1.msra.mxu0 0.0
    %129 = vmatprep.subr.mxu0 0.0
    %130 = vmatpush1.msra.mxu0 0.0
    %131 = vmatprep.subr.mxu0 0.0
    %132 = vmatpush1.msra.mxu0 0.0
    %133 = vmatprep.subr.mxu0 0.0
    %134 = vmatpush1.msra.mxu0 0.0
    %135 = vmatprep.subr.mxu0 0.0
    %136 = vmatpush1.msra.mxu0 0.0
    %137 = vmatprep.subr.mxu0 0.0
    %138 = vmatpush1.msra.mxu0 0.0
    %139 = vmatprep.subr.mxu0 0.0
    %140 = vmatpush1.msra.mxu0 0.0
    %141 = vmatprep.subr.mxu0 0.0
    %142 = vmatpush1.msra.mxu0 0.0
    %143 = vmatprep.subr.mxu0 0.0
    %144 = vmatpush1.msra.mxu0 0.0
    %145 = vmatprep.subr.mxu0 0.0
    %146 = vmatpush1.msra.mxu0 0.0
    %147 = vmatprep.subr.mxu0 0.0
    %148 = vmatpush1.msra.mxu0 0.0
    %149 = vmatprep.subr.mxu0 0.0
    %150 = vmatpush1.msra.mxu0 0.0
    %151 = vmatprep.subr.mxu0 0.0
    %152 = vmatpush1.msra.mxu0 0.0
    %153 = vmatprep.subr.mxu0 0.0
    %154 = vmatpush1.msra.mxu0 0.0
    %155 = vmatprep.subr.mxu0 0.0
    %156 = vmatpush1.msra.mxu0 0.0
    %157 = vmatprep.subr.mxu0 0.0
    %158 = vmatpush1.msra.mxu0 0.0
    %159 = vmatprep.subr.mxu0 0.0
    %160 = vmatpush1.msra.mxu0 0.0
    %161 = vmatprep.subr.mxu0 0.0
    %162 = vmatpush1.msra.mxu0 0.0
    %163 = vmatprep.subr.mxu0 0.0
    %164 = vmatpush1.msra.mxu0 0.0
    %165 = vmatprep.subr.mxu0 0.0
    %166 = vmatpush1.msra.mxu0 0.0
    %167 = vmatprep.mubr.f32.mxu0 0.0
    %168 = vmatmul.mubr.f32.gmra.mrb[0].mxu0 %v101
    %v169 = vpop.f32.mrb[0].mxu0
    %v170 = vadd.f32 %v97, %v169
    %v171 = vpop.f32.mrb[0].mxu0
    %172 = vdwg.mxu0
    %v173 = vld [vmem:[#allocation8] sm:$0xff]
    %v174 = vld [vmem:[#allocation8 + $0x8] sm:$0xff]
    %v175 = vld [vmem:[#allocation8 + $0x10] sm:$0xff]
    %v176 = vld [vmem:[#allocation8 + $0x18] sm:$0xff]
    %vm177 = vcmask 261120
    %v179 = vsel %vm177, %v89, 0
    %181 = vmatprep.subr.mxu0 0.0
    %182 = vmatpush1.msra.mxu0 %v173
    %183 = vmatprep.subr.mxu0 0.0
    %184 = vmatpush1.msra.mxu0 %v174
    %185 = vmatprep.subr.mxu0 0.0
    %186 = vmatpush1.msra.mxu0 %v175
    %187 = vmatprep.subr.mxu0 0.0
    %188 = vmatpush1.msra.mxu0 %v176
    %189 = vmatprep.subr.mxu0 0.0
    %190 = vmatpush1.msra.mxu0 0.0
    %191 = vmatprep.subr.mxu0 0.0
    %192 = vmatpush1.msra.mxu0 0.0
    %193 = vmatprep.subr.mxu0 0.0
    %194 = vmatpush1.msra.mxu0 0.0
    %195 = vmatprep.subr.mxu0 0.0
    %196 = vmatpush1.msra.mxu0 0.0
    %197 = vmatprep.subr.mxu0 0.0
    %198 = vmatpush1.msra.mxu0 0.0
    %199 = vmatprep.subr.mxu0 0.0
    %200 = vmatpush1.msra.mxu0 0.0
    %201 = vmatprep.subr.mxu0 0.0
    %202 = vmatpush1.msra.mxu0 0.0
    %203 = vmatprep.subr.mxu0 0.0
    %204 = vmatpush1.msra.mxu0 0.0
    %205 = vmatprep.subr.mxu0 0.0
    %206 = vmatpush1.msra.mxu0 0.0
    %207 = vmatprep.subr.mxu0 0.0
    %208 = vmatpush1.msra.mxu0 0.0
    %209 = vmatprep.subr.mxu0 0.0
    %210 = vmatpush1.msra.mxu0 0.0
    %211 = vmatprep.subr.mxu0 0.0
    %212 = vmatpush1.msra.mxu0 0.0
    %213 = vmatprep.subr.mxu0 0.0
    %214 = vmatpush1.msra.mxu0 0.0
    %215 = vmatprep.subr.mxu0 0.0
    %216 = vmatpush1.msra.mxu0 0.0
    %217 = vmatprep.subr.mxu0 0.0
    %218 = vmatpush1.msra.mxu0 0.0
    %219 = vmatprep.subr.mxu0 0.0
    %220 = vmatpush1.msra.mxu0 0.0
    %221 = vmatprep.subr.mxu0 0.0
    %222 = vmatpush1.msra.mxu0 0.0
    %223 = vmatprep.subr.mxu0 0.0
    %224 = vmatpush1.msra.mxu0 0.0
    %225 = vmatprep.subr.mxu0 0.0
    %226 = vmatpush1.msra.mxu0 0.0
    %227 = vmatprep.subr.mxu0 0.0
    %228 = vmatpush1.msra.mxu0 0.0
    %229 = vmatprep.subr.mxu0 0.0
    %230 = vmatpush1.msra.mxu0 0.0
    %231 = vmatprep.subr.mxu0 0.0
    %232 = vmatpush1.msra.mxu0 0.0
    %233 = vmatprep.subr.mxu0 0.0
    %234 = vmatpush1.msra.mxu0 0.0
    %235 = vmatprep.subr.mxu0 0.0
    %236 = vmatpush1.msra.mxu0 0.0
    %237 = vmatprep.subr.mxu0 0.0
    %238 = vmatpush1.msra.mxu0 0.0
    %239 = vmatprep.subr.mxu0 0.0
    %240 = vmatpush1.msra.mxu0 0.0
    %241 = vmatprep.subr.mxu0 0.0
    %242 = vmatpush1.msra.mxu0 0.0
    %243 = vmatprep.subr.mxu0 0.0
    %244 = vmatpush1.msra.mxu0 0.0
    %245 = vmatprep.mubr.f32.mxu0 0.0
    %246 = vmatmul.mubr.f32.gmra.mrb[0].mxu0 %v179
    %v247 = vpop.f32.mrb[0].mxu0
    %v248 = vadd.f32 0.0, %v247
    %v249 = vpop.f32.mrb[0].mxu0
    %250 = vdwg.mxu0
    %v251 = vadd.f32 %v170, %v248
    %v252 = vxor.u32 %v251, 2147483648
    %v253 = vmul.f32 %v252, 1.442695
    %v254 = vpow.pop %v253
    %v255 = vadd.f32 %v254, 1.0
    %v256 = vrcp.pop %v255
    %v257 = vmul.f32 1.0, %v256
    %v258 = vmul.f32 %v257, %v89
    %v259 = vld [vmem:[#allocation10] sm:$0xff]
    %v260 = vld [vmem:[#allocation10 + $0x8] sm:$0xff]
    %v261 = vld [vmem:[#allocation10 + $0x10] sm:$0xff]
    %v262 = vld [vmem:[#allocation10 + $0x18] sm:$0xff]
    %v264 = vsel %vm177, %v258, 0
    %266 = vmatprep.subr.mxu0 0.0
    %267 = vmatpush1.msra.mxu0 %v259
    %268 = vmatprep.subr.mxu0 0.0
    %269 = vmatpush1.msra.mxu0 %v260
    %270 = vmatprep.subr.mxu0 0.0
    %271 = vmatpush1.msra.mxu0 %v261
    %272 = vmatprep.subr.mxu0 0.0
    %273 = vmatpush1.msra.mxu0 %v262
    %274 = vmatprep.subr.mxu0 0.0
    %275 = vmatpush1.msra.mxu0 0.0
    %276 = vmatprep.subr.mxu0 0.0
    %277 = vmatpush1.msra.mxu0 0.0
    %278 = vmatprep.subr.mxu0 0.0
    %279 = vmatpush1.msra.mxu0 0.0
    %280 = vmatprep.subr.mxu0 0.0
    %281 = vmatpush1.msra.mxu0 0.0
    %282 = vmatprep.subr.mxu0 0.0
    %283 = vmatpush1.msra.mxu0 0.0
    %284 = vmatprep.subr.mxu0 0.0
    %285 = vmatpush1.msra.mxu0 0.0
    %286 = vmatprep.subr.mxu0 0.0
    %287 = vmatpush1.msra.mxu0 0.0
    %288 = vmatprep.subr.mxu0 0.0
    %289 = vmatpush1.msra.mxu0 0.0
    %290 = vmatprep.subr.mxu0 0.0
    %291 = vmatpush1.msra.mxu0 0.0
    %292 = vmatprep.subr.mxu0 0.0
    %293 = vmatpush1.msra.mxu0 0.0
    %294 = vmatprep.subr.mxu0 0.0
    %295 = vmatpush1.msra.mxu0 0.0
    %296 = vmatprep.subr.mxu0 0.0
    %297 = vmatpush1.msra.mxu0 0.0
    %298 = vmatprep.subr.mxu0 0.0
    %299 = vmatpush1.msra.mxu0 0.0
    %300 = vmatprep.subr.mxu0 0.0
    %301 = vmatpush1.msra.mxu0 0.0
    %302 = vmatprep.subr.mxu0 0.0
    %303 = vmatpush1.msra.mxu0 0.0
    %304 = vmatprep.subr.mxu0 0.0
    %305 = vmatpush1.msra.mxu0 0.0
    %306 = vmatprep.subr.mxu0 0.0
    %307 = vmatpush1.msra.mxu0 0.0
    %308 = vmatprep.subr.mxu0 0.0
    %309 = vmatpush1.msra.mxu0 0.0
    %310 = vmatprep.subr.mxu0 0.0
    %311 = vmatpush1.msra.mxu0 0.0
    %312 = vmatprep.subr.mxu0 0.0
    %313 = vmatpush1.msra.mxu0 0.0
    %314 = vmatprep.subr.mxu0 0.0
    %315 = vmatpush1.msra.mxu0 0.0
    %316 = vmatprep.subr.mxu0 0.0
    %317 = vmatpush1.msra.mxu0 0.0
    %318 = vmatprep.subr.mxu0 0.0
    %319 = vmatpush1.msra.mxu0 0.0
    %320 = vmatprep.subr.mxu0 0.0
    %321 = vmatpush1.msra.mxu0 0.0
    %322 = vmatprep.subr.mxu0 0.0
    %323 = vmatpush1.msra.mxu0 0.0
    %324 = vmatprep.subr.mxu0 0.0
    %325 = vmatpush1.msra.mxu0 0.0
    %326 = vmatprep.subr.mxu0 0.0
    %327 = vmatpush1.msra.mxu0 0.0
    %328 = vmatprep.subr.mxu0 0.0
    %329 = vmatpush1.msra.mxu0 0.0
    %330 = vmatprep.mubr.f32.mxu0 0.0
    %331 = vmatmul.mubr.f32.gmra.mrb[0].mxu0 %v264
    %v332 = vpop.f32.mrb[0].mxu0
    %v333 = vadd.f32 0.0, %v332
    %v334 = vpop.f32.mrb[0].mxu0
    %335 = vdwg.mxu0
    %337 = vrot.lane.b32.xlu0 %v333, 64
    %v338 = vpop.permute.xlu0 %337
    %v340 = vadd.f32 %v170, %v338
    %v341 = vtanh.pop %v340
    %342 = vrot.lane.b32.xlu0 %v89, 32
    %v343 = vpop.permute.xlu0 %342
    %v345 = vmul.f32 %v257, %v343
    %v346 = vsub.f32 1.0, %v257
    %348 = vrot.lane.b32.xlu0 %v341, 96
    %v349 = vpop.permute.xlu0 %348
    %v351 = vmul.f32 %v346, %v349
    %v352 = vadd.f32 %v345, %v351
    %354 = vrot.lane.b32.xlu0 %v352, 96
    %v355 = vpop.permute.xlu0 %354
    %357 = vst.msk [vmem:[#allocation11] sm:$0xff] %vm177, %v355
    // Predicated region
    $region46: #{tpu_custom_call.1} parent=1 // pred_check
      _
    $region47: #{tpu_custom_call.1} parent=1 // pred_check_branch
      %359 = sbr.rel (0) target = $region49
    $region48: #{tpu_custom_call.1} parent=1 // pred_region
      %s361 = ssub.s32 128, 128
      %362 = vsyncadd [#allocation4], %s361
      %s364 = sshll.u32 [#allocation11], 4
      %s365 = int_to_ptr.vmem [resolvable:$true] %s364
      %367 = dma.vmem_to_hbm [thread:$0]  %s365, 128, %s6, [#allocation4]
    $region49: #{tpu_custom_call.1} parent=1 // pred_fallthru
      _
    // Predicated region
    $region50: #{tpu_custom_call.1} parent=1 // pred_check
      _
    $region51: #{tpu_custom_call.1} parent=1 // pred_check_branch
      %369 = sbr.rel (0) target = $region53
    $region52: #{tpu_custom_call.1} parent=1 // pred_region
      %370 = dma.done [#allocation4], 128
    $region53: #{tpu_custom_call.1} parent=1 // pred_fallthru
      _
    %371 = vsyncpa [#allocation3], 1
    %372 = vsyncpa [#allocation6], 1
    %373 = vsyncpa [#allocation9], 1
    %374 = vsyncpa [#allocation4], 1

</llo_original>
